<compile_context>
chip_gen: v7x
topology: tpu7x:2x2x1
jax: 0.10.0
libtpu: 0.0.40
codegen_flags: <defaults>
</compile_context>

<pallas_src>
import functools

import jax
import jax.numpy as jnp
import numpy as np
from jax.experimental import pallas as pl
from jax.experimental.pallas import tpu as pltpu


def _round_up(x, m):
    return ((x + m - 1) // m) * m


def _ldam_kernel(x_ref, t_ref, bm_ref, wt_ref, loss_ref, num_acc, den_acc, *, s):
    """One batch tile: margin-subtract, scale, log-softmax, gather, partial sums."""
    i = pl.program_id(0)

    @pl.when(i == 0)
    def _init():
        num_acc[...] = jnp.zeros_like(num_acc)
        den_acc[...] = jnp.zeros_like(den_acc)

    x = x_ref[...].astype(jnp.float32)      # [TB, C] (cast in-kernel; bf16 streams cheap)
    t = t_ref[...]                          # [TB, 1] i32 target class
    bm = bm_ref[...]                        # [TB, 1] f32 = m_list[target]  (hoisted gather)
    wt = wt_ref[...]                        # [TB, 1] f32 = weight[target]  (hoisted gather)
    TB, C = x.shape

    # one-hot of target (equivalent to index.scatter_(1, target, 1))
    col = jax.lax.broadcasted_iota(jnp.int32, (TB, C), 1)
    onehot = col == t                       # [TB, C] bool

    # output = where(onehot, x - batch_m, x);  z = s * output
    z = s * jnp.where(onehot, x - bm, x)

    # stable log-softmax pieces (all f32); EUP takes the exp, XLU the reductions.
    zmax = jnp.max(z, axis=1, keepdims=True)                               # [TB,1]
    lse = jnp.log(jnp.sum(jnp.exp(z - zmax), axis=1, keepdims=True)) + zmax
    z_t = jnp.sum(jnp.where(onehot, z, 0.0), axis=1, keepdims=True)        # [TB,1]

    # partial weighted-CE sums for this tile; -logp_t = lse - z_t.
    # Padded rows have wt == 0 -> contribute nothing to num or den.
    num_acc[...] += jnp.sum(wt * (lse - z_t))
    den_acc[...] += jnp.sum(wt)

    @pl.when(i == pl.num_programs(0) - 1)
    def _finalize():
        # exact divide: approx reciprocal would break the 1e-5 tolerance vs reference
        loss_ref[...] = num_acc[...] / den_acc[...]


def ldam_loss(x, target, m_list, weight, s=30.0, tb=512):
    """LDAM loss forward.

    x:[B,C] f32/bf16 logits, target:[B] int, m_list/weight:[C] -> scalar f32.
    Matches F.cross_entropy(s*output, target, weight=weight) (weighted mean).
    """
    B, C = x.shape
    TB = min(int(tb), _round_up(B, 8))      # tile rows, multiple of 8
    Bp = _round_up(B, TB)                   # padded batch
    nt = Bp // TB

    target = target.astype(jnp.int32)
    m32 = m_list.astype(jnp.float32)
    w32 = weight.astype(jnp.float32)

    # hoist per-class gathers out of the kernel (tiny XLA gathers over [B] rows)
    bm = m32[target].reshape(B, 1)          # [B,1] margin of the target class
    wt = w32[target].reshape(B, 1)          # [B,1] CE weight of the target class
    t2 = target.reshape(B, 1)

    if Bp != B:
        pad = Bp - B
        # padded rows: x=0, target=0, margin=0, weight=0 -> contribute 0 to num and den
        x = jnp.pad(x, ((0, pad), (0, 0)))
        t2 = jnp.pad(t2, ((0, pad), (0, 0)))
        bm = jnp.pad(bm, ((0, pad), (0, 0)))
        wt = jnp.pad(wt, ((0, pad), (0, 0)))

    out = pl.pallas_call(
        functools.partial(_ldam_kernel, s=float(s)),
        out_shape=jax.ShapeDtypeStruct((1, 1), jnp.float32),
        grid=(nt,),
        in_specs=[
            pl.BlockSpec((TB, C), lambda i: (i, 0)),   # logits tile (streamed)
            pl.BlockSpec((TB, 1), lambda i: (i, 0)),   # target
            pl.BlockSpec((TB, 1), lambda i: (i, 0)),   # m_list[target]
            pl.BlockSpec((TB, 1), lambda i: (i, 0)),   # weight[target]
        ],
        out_specs=pl.BlockSpec((1, 1), lambda i: (0, 0)),   # accumulator-resident output
        scratch_shapes=[
            pltpu.VMEM((1, 1), jnp.float32),   # running numerator  sum(w_t * -logp_t)
            pltpu.VMEM((1, 1), jnp.float32),   # running denominator sum(w_t)
        ],
        compiler_params=pltpu.CompilerParams(
            dimension_semantics=("arbitrary",),        # sequential accumulator axis
            vmem_limit_bytes=32 * 1024 * 1024,
        ),
    )(x, t2, bm, wt)
    return out[0, 0]


def _ldam_loss_ref(x, target, m_list, weight, s=30.0):
    """Pure-JAX reference (mirrors the PyTorch forward)."""
    B, C = x.shape
    onehot = jax.nn.one_hot(target, C, dtype=jnp.float32)
    batch_m = (m_list[None, :] @ onehot.T).reshape(-1, 1)
    out = jnp.where(onehot.astype(bool), x.astype(jnp.float32) - batch_m,
                    x.astype(jnp.float32))
    z = s * out
    logp = jax.nn.log_softmax(z, axis=1)
    logp_t = jnp.take_along_axis(logp, target[:, None], axis=1)[:, 0]
    w_t = weight[target]
    return -jnp.sum(w_t * logp_t) / jnp.sum(w_t)


if __name__ == "__main__":
    # ----- deterministic synthetic "module init" (LDAMLoss.__init__) -----
    C = 16                                           # num classes
    max_m = 0.5                                      # cfg.LOSS.LDAM.MAX_MARGIN
    num_class_list = np.array([1000 // (i + 1) for i in range(C)], dtype=np.float64)
    m_list_np = 1.0 / np.sqrt(np.sqrt(num_class_list))
    m_list_np = m_list_np * (max_m / np.max(m_list_np))
    m_list = jnp.asarray(m_list_np, dtype=jnp.float32)
    # scheduler == 'default' -> per-class CE weight of all ones
    weight = jnp.ones((C,), dtype=jnp.float32)

    key = jax.random.PRNGKey(0)

    # case 1: single tile (B divisible by 8)
    B = 8
    kx, kt, key = jax.random.split(key, 3)
    x = jax.random.normal(kx, (B, C), dtype=jnp.float32)
    target = jax.random.randint(kt, (B,), 0, C, dtype=jnp.int32)
    loss = jax.block_until_ready(ldam_loss(x, target, m_list, weight, s=30.0))
    ref = _ldam_loss_ref(x, target, m_list, weight, s=30.0)
    assert jnp.allclose(loss, ref, rtol=1e-5, atol=1e-5), (loss, ref)

    # case 2: multi-tile accumulator path + batch padding (B=20, tb=8 -> 3 tiles, 4 pad rows)
    B2 = 20
    kx2, kt2, key = jax.random.split(key, 3)
    x2 = jax.random.normal(kx2, (B2, C), dtype=jnp.float32)
    target2 = jax.random.randint(kt2, (B2,), 0, C, dtype=jnp.int32)
    loss2 = jax.block_until_ready(ldam_loss(x2, target2, m_list, weight, s=30.0, tb=8))
    ref2 = _ldam_loss_ref(x2, target2, m_list, weight, s=30.0)
    assert jnp.allclose(loss2, ref2, rtol=1e-5, atol=1e-5), (loss2, ref2)

    # case 3: bf16 logits streamed at half the HBM bytes (kernel casts to f32 in VMEM)
    B3 = 24
    kx3, kt3, key = jax.random.split(key, 3)
    x3 = jax.random.normal(kx3, (B3, C), dtype=jnp.float32).astype(jnp.bfloat16)
    target3 = jax.random.randint(kt3, (B3,), 0, C, dtype=jnp.int32)
    loss3 = jax.block_until_ready(ldam_loss(x3, target3, m_list, weight, s=30.0, tb=16))
    ref3 = _ldam_loss_ref(x3, target3, m_list, weight, s=30.0)
    assert jnp.allclose(loss3, ref3, rtol=1e-4, atol=1e-4), (loss3, ref3)

    print("KERNEL_OK")
</pallas_src>

<mosaic_0001>
module attributes {stable_mosaic.version = 11 : i64} {
  func.func @_ldam_kernel(%arg0: i32, %arg1: memref<8x16xf32, #tpu.memory_space<vmem>>, %arg2: memref<8x1xi32, #tpu.memory_space<vmem>>, %arg3: memref<8x1xf32, #tpu.memory_space<vmem>>, %arg4: memref<8x1xf32, #tpu.memory_space<vmem>>, %arg5: memref<1x1xf32, #tpu.memory_space<vmem>>, %arg6: memref<1x1xf32, #tpu.memory_space<vmem>>, %arg7: memref<1x1xf32, #tpu.memory_space<vmem>>) attributes {dimension_semantics = [#tpu.dimension_semantics<arbitrary>], iteration_bounds = array<i64: 1>, scalar_prefetch = 0 : i64, scratch_operands = 2 : i64, tpu.core_type = #tpu.core_type<tc>, window_params = [{transform_indices = @transform_0, window_bounds = array<i64: 8, 16>}, {transform_indices = @transform_1, window_bounds = array<i64: 8, 1>}, {transform_indices = @transform_2, window_bounds = array<i64: 8, 1>}, {transform_indices = @transform_3, window_bounds = array<i64: 8, 1>}, {pipeline_mode = #tpu.pipeline_mode<synchronous>, transform_indices = @transform_4, window_bounds = array<i64: 1, 1>}]} {
    %c0_i32 = arith.constant 0 : i32
    %0 = arith.cmpi eq, %arg0, %c0_i32 : i32
    %1 = arith.extui %0 : i1 to i32
    %c0_i32_0 = arith.constant 0 : i32
    %2 = arith.cmpi ne, %1, %c0_i32_0 : i32
    scf.if %2 {
      %cst_24 = arith.constant 0.000000e+00 : f32
      %49 = vector.broadcast %cst_24 : f32 to vector<1x1xf32>
      %c0_25 = arith.constant 0 : index
      %c0_26 = arith.constant 0 : index
      %50 = vector.load %arg6[%c0_25, %c0_26] : memref<1x1xf32, #tpu.memory_space<vmem>>, vector<1x1xf32>
      tpu.vector_store %arg6[%c0_25, %c0_26], %49 {strides = array<i32>} : memref<1x1xf32, #tpu.memory_space<vmem>>, vector<1x1xf32>,
      %cst_27 = arith.constant 0.000000e+00 : f32
      %51 = vector.broadcast %cst_27 : f32 to vector<1x1xf32>
      %c0_28 = arith.constant 0 : index
      %c0_29 = arith.constant 0 : index
      %52 = vector.load %arg7[%c0_28, %c0_29] : memref<1x1xf32, #tpu.memory_space<vmem>>, vector<1x1xf32>
      tpu.vector_store %arg7[%c0_28, %c0_29], %51 {strides = array<i32>} : memref<1x1xf32, #tpu.memory_space<vmem>>, vector<1x1xf32>,
    } else {
    }
    %c0 = arith.constant 0 : index
    %c0_1 = arith.constant 0 : index
    %3 = vector.load %arg1[%c0, %c0_1] : memref<8x16xf32, #tpu.memory_space<vmem>>, vector<8x16xf32>
    %c0_2 = arith.constant 0 : index
    %c0_3 = arith.constant 0 : index
    %4 = vector.load %arg2[%c0_2, %c0_3] : memref<8x1xi32, #tpu.memory_space<vmem>>, vector<8x1xi32>
    %c0_4 = arith.constant 0 : index
    %c0_5 = arith.constant 0 : index
    %5 = vector.load %arg3[%c0_4, %c0_5] : memref<8x1xf32, #tpu.memory_space<vmem>>, vector<8x1xf32>
    %c0_6 = arith.constant 0 : index
    %c0_7 = arith.constant 0 : index
    %6 = vector.load %arg4[%c0_6, %c0_7] : memref<8x1xf32, #tpu.memory_space<vmem>>, vector<8x1xf32>
    %7 = tpu.iota {dimensions = array<i32: 1>} : vector<8x16xi32>
    %8 = vector.broadcast %4 : vector<8x1xi32> to vector<8x16xi32>
    %9 = arith.cmpi eq, %7, %8 : vector<8x16xi32>
    %10 = vector.broadcast %5 : vector<8x1xf32> to vector<8x16xf32>
    %11 = arith.subf %3, %10 : vector<8x16xf32>
    %12 = arith.select %9, %11, %3 : vector<8x16xi1>, vector<8x16xf32>
    %cst = arith.constant 3.000000e+01 : f32
    %13 = vector.broadcast %cst : f32 to vector<8x16xf32>
    %14 = arith.mulf %13, %12 : vector<8x16xf32>
    %cst_8 = arith.constant dense<0xFF800000> : vector<8xf32>
    %15 = vector.multi_reduction <maximumf>, %14, %cst_8 [1] : vector<8x16xf32> to vector<8xf32>
    %16 = vector.shape_cast %15 : vector<8xf32> to vector<8x1xf32>
    %17 = vector.broadcast %16 : vector<8x1xf32> to vector<8x16xf32>
    %18 = arith.subf %14, %17 : vector<8x16xf32>
    %19 = math.exp %18 : vector<8x16xf32>
    %cst_9 = arith.constant dense<0.000000e+00> : vector<8xf32>
    %20 = vector.multi_reduction <add>, %19, %cst_9 [1] : vector<8x16xf32> to vector<8xf32>
    %21 = vector.shape_cast %20 : vector<8xf32> to vector<8x1xf32>
    %22 = math.log %21 : vector<8x1xf32>
    %23 = arith.addf %22, %16 : vector<8x1xf32>
    %cst_10 = arith.constant 0.000000e+00 : f32
    %24 = vector.broadcast %cst_10 : f32 to vector<8x16xf32>
    %25 = arith.select %9, %14, %24 : vector<8x16xi1>, vector<8x16xf32>
    %cst_11 = arith.constant dense<0.000000e+00> : vector<8xf32>
    %26 = vector.multi_reduction <add>, %25, %cst_11 [1] : vector<8x16xf32> to vector<8xf32>
    %27 = vector.shape_cast %26 : vector<8xf32> to vector<8x1xf32>
    %c0_12 = arith.constant 0 : index
    %c0_13 = arith.constant 0 : index
    %28 = vector.load %arg6[%c0_12, %c0_13] : memref<1x1xf32, #tpu.memory_space<vmem>>, vector<1x1xf32>
    %29 = arith.subf %23, %27 : vector<8x1xf32>
    %30 = arith.mulf %6, %29 : vector<8x1xf32>
    %31 = vector.shape_cast %30 : vector<8x1xf32> to vector<1x8x1xf32>
    %cst_14 = arith.constant dense<0.000000e+00> : vector<1xf32>
    %32 = vector.multi_reduction <add>, %31, %cst_14 [1, 2] : vector<1x8x1xf32> to vector<1xf32>
    %33 = vector.shape_cast %32 : vector<1xf32> to vector<1x1x1xf32>
    %34 = vector.extract %33[0, 0, 0] : f32 from vector<1x1x1xf32>
    %35 = vector.broadcast %34 : f32 to vector<1x1xf32>
    %36 = arith.addf %28, %35 : vector<1x1xf32>
    %c0_15 = arith.constant 0 : index
    %c0_16 = arith.constant 0 : index
    %37 = vector.load %arg6[%c0_15, %c0_16] : memref<1x1xf32, #tpu.memory_space<vmem>>, vector<1x1xf32>
    tpu.vector_store %arg6[%c0_15, %c0_16], %36 {strides = array<i32>} : memref<1x1xf32, #tpu.memory_space<vmem>>, vector<1x1xf32>,
    %c0_17 = arith.constant 0 : index
    %c0_18 = arith.constant 0 : index
    %38 = vector.load %arg7[%c0_17, %c0_18] : memref<1x1xf32, #tpu.memory_space<vmem>>, vector<1x1xf32>
    %39 = vector.shape_cast %6 : vector<8x1xf32> to vector<1x8x1xf32>
    %cst_19 = arith.constant dense<0.000000e+00> : vector<1xf32>
    %40 = vector.multi_reduction <add>, %39, %cst_19 [1, 2] : vector<1x8x1xf32> to vector<1xf32>
    %41 = vector.shape_cast %40 : vector<1xf32> to vector<1x1x1xf32>
    %42 = vector.extract %41[0, 0, 0] : f32 from vector<1x1x1xf32>
    %43 = vector.broadcast %42 : f32 to vector<1x1xf32>
    %44 = arith.addf %38, %43 : vector<1x1xf32>
    %c0_20 = arith.constant 0 : index
    %c0_21 = arith.constant 0 : index
    %45 = vector.load %arg7[%c0_20, %c0_21] : memref<1x1xf32, #tpu.memory_space<vmem>>, vector<1x1xf32>
    tpu.vector_store %arg7[%c0_20, %c0_21], %44 {strides = array<i32>} : memref<1x1xf32, #tpu.memory_space<vmem>>, vector<1x1xf32>,
    %c0_i32_22 = arith.constant 0 : i32
    %46 = arith.cmpi eq, %arg0, %c0_i32_22 : i32
    %47 = arith.extui %46 : i1 to i32
    %c0_i32_23 = arith.constant 0 : i32
    %48 = arith.cmpi ne, %47, %c0_i32_23 : i32
    scf.if %48 {
      %c0_24 = arith.constant 0 : index
      %c0_25 = arith.constant 0 : index
      %49 = vector.load %arg6[%c0_24, %c0_25] : memref<1x1xf32, #tpu.memory_space<vmem>>, vector<1x1xf32>
      %c0_26 = arith.constant 0 : index
      %c0_27 = arith.constant 0 : index
      %50 = vector.load %arg7[%c0_26, %c0_27] : memref<1x1xf32, #tpu.memory_space<vmem>>, vector<1x1xf32>
      %51 = arith.divf %49, %50 : vector<1x1xf32>
      %c0_28 = arith.constant 0 : index
      %c0_29 = arith.constant 0 : index
      %52 = vector.load %arg5[%c0_28, %c0_29] : memref<1x1xf32, #tpu.memory_space<vmem>>, vector<1x1xf32>
      tpu.vector_store %arg5[%c0_28, %c0_29], %51 {strides = array<i32>} : memref<1x1xf32, #tpu.memory_space<vmem>>, vector<1x1xf32>,
    } else {
    }
    return
  }
  func.func @transform_0(%arg0: i32) -> (i32, i32) {
    %c0_i32 = arith.constant 0 : i32
    %c0_i32_0 = arith.constant 0 : i32
    return %arg0, %c0_i32 : i32, i32
  }
  func.func @transform_1(%arg0: i32) -> (i32, i32) {
    %c0_i32 = arith.constant 0 : i32
    %c0_i32_0 = arith.constant 0 : i32
    return %arg0, %c0_i32 : i32, i32
  }
  func.func @transform_2(%arg0: i32) -> (i32, i32) {
    %c0_i32 = arith.constant 0 : i32
    %c0_i32_0 = arith.constant 0 : i32
    return %arg0, %c0_i32 : i32, i32
  }
  func.func @transform_3(%arg0: i32) -> (i32, i32) {
    %c0_i32 = arith.constant 0 : i32
    %c0_i32_0 = arith.constant 0 : i32
    return %arg0, %c0_i32 : i32, i32
  }
  func.func @transform_4(%arg0: i32) -> (i32, i32) {
    %c0_i32 = arith.constant 0 : i32
    %c0_i32_0 = arith.constant 0 : i32
    %c0_i32_1 = arith.constant 0 : i32
    return %c0_i32, %c0_i32_0 : i32, i32
  }
}

</mosaic_0001>

<llo_original>
// kernel: tpu_custom_call.1
$region0: #{tpu_custom_call.1}
  #allocation0 [shape = 'u32[]', space=smem, size = 0x4, offset = 0x4, fixed_abs, tag = 'smem constant byte address 0x4 - core index']
  #allocation1 [shape = 'u32[144,128]{1,0:T(1,128)}', space=vmem, size = 0x12000, scoped, tag = 'internal scratch']
  #allocation2 [shape = 'f32[1,1]{1,0:T(1,128)}', space=vmem, size = 0x200, scoped, tag = 'scratch operand']
  #allocation3 [shape = 'f32[1,1]{1,0:T(1,128)}', space=vmem, size = 0x200, scoped, tag = 'scratch operand']
  %s0 = inlined_call_operand.vmem [shape: f32[8,16], index: 0, kind: input, shape index: {}]
  %s1 = inlined_call_operand.vmem [shape: s32[8,1], index: 1, kind: input, shape index: {}]
  %s2 = inlined_call_operand.vmem [shape: f32[8,1], index: 2, kind: input, shape index: {}]
  %s3 = inlined_call_operand.vmem [shape: f32[8,1], index: 3, kind: input, shape index: {}]
  %s4 = inlined_call_operand.hbm [shape: f32[1,1], index: 4, kind: output, shape index: {}]
  %s5 = sld [smem:[#allocation0]]
  $region34: #{tpu_custom_call.1} parent=0
    _
  %s7 = ssub.s32 1, %s5
  %s8 = scalar_select 0, %s7, %s5
  $region1: #{tpu_custom_call.1} parent=0
    #allocation4 [shape = 'u8[512]{0}', space=vmem, size = 0x400, scoped, tag = 'output window, operand 0, single buffered']
    #allocation5 [shape = 's32[1]{0}', space=sflag, size = 0x4, scoped, tag = 'scoped memory for tpu_custom_call.1']
    %9 = vsyncpa [#allocation5], 0
    // Predicated region
    $region2: #{tpu_custom_call.1} parent=1 // pred_check
      _
    $region3: #{tpu_custom_call.1} parent=1 // pred_check_branch
      %11 = sbr.rel (0) target = $region5
    $region4: #{tpu_custom_call.1} parent=1 // pred_region
      _
    $region5: #{tpu_custom_call.1} parent=1 // pred_fallthru
      _
    // Predicated region
    $region6: #{tpu_custom_call.1} parent=1 // pred_check
      _
    $region7: #{tpu_custom_call.1} parent=1 // pred_check_branch
      %13 = sbr.rel (0) target = $region9
    $region8: #{tpu_custom_call.1} parent=1 // pred_region
      _
    $region9: #{tpu_custom_call.1} parent=1 // pred_fallthru
      _
    // Predicated region
    $region10: #{tpu_custom_call.1} parent=1 // pred_check
      _
    $region11: #{tpu_custom_call.1} parent=1 // pred_check_branch
      %15 = sbr.rel (0) target = $region13
    $region12: #{tpu_custom_call.1} parent=1 // pred_region
      _
    $region13: #{tpu_custom_call.1} parent=1 // pred_fallthru
      _
    // Predicated region
    $region14: #{tpu_custom_call.1} parent=1 // pred_check
      _
    $region15: #{tpu_custom_call.1} parent=1 // pred_check_branch
      %17 = sbr.rel (0) target = $region17
    $region16: #{tpu_custom_call.1} parent=1 // pred_region
      _
    $region17: #{tpu_custom_call.1} parent=1 // pred_fallthru
      _
    %p18 = scmp.eq.s32.totalorder 0, 0
    // Predicated region
    $region18: #{tpu_custom_call.1} parent=1 // pred_check
      %p19 = pneg %p18
    $region19: #{tpu_custom_call.1} parent=1 // pred_check_branch
      %21 = sbr.rel (%p19) target = $region21
    $region20: #{tpu_custom_call.1} parent=1 // pred_region
      %vm22 = vcmask 0
      %23 = vst.msk [vmem:[#allocation2] sm:$0x1] %vm22, 0.0
      %24 = vst.msk [vmem:[#allocation3] sm:$0x1] %vm22, 0.0
    $region21: #{tpu_custom_call.1} parent=1 // pred_fallthru
      _
    %v25 = vld [vmem:[%s0] sm:$0xff]
    %v26 = vld [vmem:[%s1] sm:$0xff]
    %v27 = vld [vmem:[%s2] sm:$0xff]
    %v28 = vld [vmem:[%s3] sm:$0xff]
    %v29 = vlaneseq
    %v30 = vand.u32 %v29, 127
    %31 = vset.pattern.permute.xlu0 0
    %32 = vperm.xlu0 %31, %v26
    %v33 = vpop.permute.xlu0 %32
    %vm34 = vcmp.eq.s32.totalorder %v30, %v33
    %36 = vset.pattern.permute.xlu0 0
    %37 = vperm.xlu0 %36, %v27
    %v38 = vpop.permute.xlu0 %37
    %v40 = vsub.f32 %v25, %v38
    %v41 = vsel %vm34, %v40, %v25
    %v42 = vmul.f32 %v41, 30.0
    %vm43 = vcmask 130048
    %v44 = vsel %vm43, %v42, -inf
    %45 = vmax.xlane.f32.xlu0 %v44
    %v46 = vpop.xlane.xlu0 %45
    %v47 = vsub.f32 %v42, %v46
    %v48 = vmul.f32 %v47, 1.442695
    %v49 = vpow.pop %v48
    %v50 = vsel %vm43, %v49, 0.0
    %51 = vadd.xlane.f32.xlu0 %v50
    %v52 = vpop.xlane.xlu0 %51
    %v53 = vlog2.pop %v52
    %v54 = vmul.f32 %v53, 0.6931472
    %v55 = vadd.f32 %v54, %v46
    %v56 = vsel %vm34, %v42, 0.0
    %v57 = vsel %vm43, %v56, 0.0
    %58 = vadd.xlane.f32.xlu0 %v57
    %v59 = vpop.xlane.xlu0 %58
    %v60 = vld [vmem:[#allocation2] sm:$0x1]
    %v61 = vsub.f32 %v55, %v59
    %v62 = vmul.f32 %v28, %v61
    %vm63 = vcmask 7168
    %v64 = vsel %vm63, %v62, 0.0
    %65 = vadd.xlane.f32.xlu0 %v64
    %v66 = vpop.xlane.xlu0 %65
    %v67 = vrot.slane %v66, 4
    %v68 = vadd.f32 %v66, %v67
    %v69 = vrot.slane %v68, 2
    %v70 = vadd.f32 %v68, %v69
    %v71 = vrot.slane %v70, 1
    %v72 = vadd.f32 %v70, %v71
    %s73 = vtos %v72
    %v74 = vstv %s73
    %v75 = vadd.f32 %v60, %v74
    %vm76 = vcmask 0
    %77 = vst.msk [vmem:[#allocation2] sm:$0x1] %vm76, %v75
    %v78 = vld [vmem:[#allocation3] sm:$0x1]
    %v79 = vsel %vm63, %v28, 0.0
    %80 = vadd.xlane.f32.xlu0 %v79
    %v81 = vpop.xlane.xlu0 %80
    %v82 = vrot.slane %v81, 4
    %v83 = vadd.f32 %v81, %v82
    %v84 = vrot.slane %v83, 2
    %v85 = vadd.f32 %v83, %v84
    %v86 = vrot.slane %v85, 1
    %v87 = vadd.f32 %v85, %v86
    %s88 = vtos %v87
    %v89 = vstv %s88
    %v90 = vadd.f32 %v78, %v89
    %91 = vst.msk [vmem:[#allocation3] sm:$0x1] %vm76, %v90
    // Predicated region
    $region22: #{tpu_custom_call.1} parent=1 // pred_check
      %p92 = pneg %p18
    $region23: #{tpu_custom_call.1} parent=1 // pred_check_branch
      %94 = sbr.rel (%p92) target = $region25
    $region24: #{tpu_custom_call.1} parent=1 // pred_region
      %v95 = vld [vmem:[#allocation2] sm:$0x1]
      %v96 = vld [vmem:[#allocation3] sm:$0x1]
      %v97 = vrcp.pop %v96
      %v98 = vmul.f32 %v95, %v97
      %99 = vst.msk [vmem:[#allocation4] sm:$0x1] %vm76, %v98
    $region25: #{tpu_custom_call.1} parent=1 // pred_fallthru
      _
    // Predicated region
    $region26: #{tpu_custom_call.1} parent=1 // pred_check
      _
    $region27: #{tpu_custom_call.1} parent=1 // pred_check_branch
      %101 = sbr.rel (0) target = $region29
    $region28: #{tpu_custom_call.1} parent=1 // pred_region
      %s103 = ssub.s32 16, 16
      %104 = vsyncadd [#allocation5], %s103
      %s106 = sshll.u32 [#allocation4], 4
      %s107 = int_to_ptr.vmem [resolvable:$true] %s106
      %109 = dma.vmem_to_hbm [thread:$0]  %s107, 16, %s4, [#allocation5]
    $region29: #{tpu_custom_call.1} parent=1 // pred_fallthru
      _
    // Predicated region
    $region30: #{tpu_custom_call.1} parent=1 // pred_check
      _
    $region31: #{tpu_custom_call.1} parent=1 // pred_check_branch
      %111 = sbr.rel (0) target = $region33
    $region32: #{tpu_custom_call.1} parent=1 // pred_region
      %112 = dma.done [#allocation5], 16
    $region33: #{tpu_custom_call.1} parent=1 // pred_fallthru
      _
    %113 = vsyncpa [#allocation5], 1

</llo_original>
